<compile_context>
chip_gen: v6e
topology: v6e:2x2x1
jax: 0.10.0
libtpu: 0.0.40
codegen_flags: <defaults>
</compile_context>

<pallas_src>
import functools

import jax
import jax.numpy as jnp
from jax.experimental import pallas as pl
from jax.experimental.pallas import tpu as pltpu


def _up_kernel(x_ref, w_ref, b_ref, o_ref, xs_ref, *, W, HW):
    """One lane-block of B images, flattened as (Cin, L) with L = B*H*W.

    x_ref : (Cin, L)         input activations, pixels (image-major) on lanes
    w_ref : (4*Cout, 4*Cin)  fused parity/shift weight matrix
    b_ref : (4*Cout, 1)      bias, tiled per parity block
    o_ref : (4*Cout, L)      parity-major output (lane-dense store)
    xs_ref: (4*Cin, L) f32   VMEM scratch holding the 4 shifted taps (im2col)
    """
    Cin = x_ref.shape[0]
    L = x_ref.shape[1]
    x = x_ref[...]

    # Single (1, L) iota mask row; jnp.where broadcasts it over channels.  The masks
    # zero taps that fall off the right / bottom edge of each image, which also makes
    # the circular roll correct across image boundaries in the flattened layout.
    lane = jax.lax.broadcasted_iota(jnp.int32, (1, L), 1)
    not_last_col = (lane % W) != (W - 1)
    not_last_row = (lane % HW) < (HW - W)

    def shifted(s):
        # y[:, n] = x[:, (n + s) % L]  -- XLU lane rotate, no VMEM copy.
        return pltpu.roll(x, L - s, 1)

    # The 4 taps of a stride-2, k=3, pad=1 transposed conv:
    #   x00 = x[i, j], x01 = x[i, j+1], x10 = x[i+1, j], x11 = x[i+1, j+1]
    xs_ref[pl.ds(0 * Cin, Cin), :] = x
    xs_ref[pl.ds(1 * Cin, Cin), :] = jnp.where(not_last_col, shifted(1), 0.0)
    xs_ref[pl.ds(2 * Cin, Cin), :] = jnp.where(not_last_row, shifted(W), 0.0)
    xs_ref[pl.ds(3 * Cin, Cin), :] = jnp.where(not_last_col & not_last_row,
                                               shifted(W + 1), 0.0)

    # Single fused MXU matmul: (4*Cout, 4*Cin) @ (4*Cin, L) -> (4*Cout, L).
    # (At U-Net channel counts one would split per output parity with exact K to skip
    #  the structurally-zero blocks; at 4*Cin = 16 the zero blocks are free.)
    acc = jax.lax.dot_general(
        w_ref[...], xs_ref[...],
        dimension_numbers=(((1,), (0,)), ((), ())),
        preferred_element_type=jnp.float32,
    )
    acc = jnp.maximum(acc + b_ref[...], 0.0)      # bias + ReLU fused
    o_ref[...] = acc.astype(o_ref.dtype)


def up_forward(x_nchw, weight, bias):
    """ConvTranspose2d(Cin->Cout, 3, stride=2, padding=1, output_padding=1) + ReLU.

    x_nchw: (N, Cin, H, W) float32
    weight: (Cin, Cout, 3, 3)  (PyTorch ConvTranspose2d layout)
    bias:   (Cout,)
    returns (N, Cout, 2*H, 2*W)
    """
    N, Cin, H, W = x_nchw.shape
    Cout = weight.shape[1]
    HW = H * W

    # Collapse the batch onto lanes: (N, Cin, H, W) -> (Cin, N*HW).  The N<->Cin swap
    # is a tiny XLA copy on the input (4x smaller than the output) and buys a
    # lane-dense, >=512-wide block per grid step.
    x_flat = jnp.transpose(x_nchw.reshape(N, Cin, HW), (1, 0, 2)).reshape(Cin, N * HW)

    # Fold the 3x3 transposed-conv weights into one (4*Cout, 4*Cin) matrix.
    # Row block p = 2*dy + dx (output parity); column blocks = taps [x00, x01, x10, x11].
    def tap(ky, kx):                                  # (Cout, Cin) slice of the kernel
        return jnp.transpose(weight[:, :, ky, kx], (1, 0))

    z = jnp.zeros((Cout, Cin), weight.dtype)
    w_mat = jnp.concatenate([
        jnp.concatenate([tap(1, 1), z,         z,         z        ], axis=1),  # (even, even)
        jnp.concatenate([tap(1, 2), tap(1, 0), z,         z        ], axis=1),  # (even, odd)
        jnp.concatenate([tap(2, 1), z,         tap(0, 1), z        ], axis=1),  # (odd, even)
        jnp.concatenate([tap(2, 2), tap(2, 0), tap(0, 2), tap(0, 0)], axis=1),  # (odd, odd)
    ], axis=0)                                        # (4*Cout, 4*Cin)
    b_col = jnp.tile(bias, 4).reshape(4 * Cout, 1)    # (4*Cout, 1)

    # ---- lane-block / grid choice --------------------------------------------
    LANE_TARGET = 512                         # >= 4 lane tiles per grid step
    B = max(1, min(N, LANE_TARGET // HW))     # images per grid step
    while N % B:
        B -= 1
    # Keep a 2-way "parallel" grid (v7x has 2 TensorCores) when that still leaves
    # >= LANE_TARGET lanes per step.
    if N // B == 1 and N % 2 == 0 and (N // 2) * HW >= LANE_TARGET:
        B = N // 2
    L = B * HW
    G = N // B
    if G > 1 and L % 128:                     # non-full lane blocks must be 128-aligned
        B, L, G = N, N * HW, 1
    # Note: for very large H*W, add an H row-tile grid axis with a 1-row halo instead
    # of holding the whole flattened block (scratch is 4*Cin*L floats).

    kernel = functools.partial(_up_kernel, W=W, HW=HW)

    # Advisory cost: only 9 of the 16 (Cout x Cin) weight blocks are non-zero.
    flops = 2 * 9 * Cout * Cin * N * HW
    bytes_accessed = 4 * (Cin * N * HW + (4 * Cout) * (4 * Cin) + 4 * Cout
                          + 4 * Cout * N * HW)
    # VMEM budget: double-buffered in/out blocks + im2col scratch + f32 accumulator.
    vmem_need = (4 * L * (2 * Cin + 4 * Cin + 2 * 4 * Cout + 4 * Cout)
                 + 4 * (4 * Cout) * (4 * Cin + 1))
    vmem_limit = int(min(max(4 * vmem_need, 16 << 20), 48 << 20))

    out = pl.pallas_call(
        kernel,
        out_shape=jax.ShapeDtypeStruct((4 * Cout, N * HW), x_nchw.dtype),
        grid=(G,),
        in_specs=[
            pl.BlockSpec((Cin, L), lambda g: (0, g)),
            pl.BlockSpec((4 * Cout, 4 * Cin), lambda g: (0, 0)),
            pl.BlockSpec((4 * Cout, 1), lambda g: (0, 0)),
        ],
        out_specs=pl.BlockSpec((4 * Cout, L), lambda g: (0, g)),
        scratch_shapes=[pltpu.VMEM((4 * Cin, L), jnp.float32)],
        compiler_params=pltpu.CompilerParams(
            dimension_semantics=("parallel",),
            vmem_limit_bytes=vmem_limit,
        ),
        cost_estimate=pl.CostEstimate(
            flops=flops, transcendentals=0, bytes_accessed=bytes_accessed),
    )(x_flat, w_mat, b_col)

    # Depth-to-space: rows are [dy, dx, co], lanes are [n, i, j].  One XLA
    # transpose-copy of the small kernel output (free reshape + coarse interleave).
    y = out.reshape(2, 2, Cout, N, H, W)
    y = jnp.transpose(y, (3, 2, 4, 0, 5, 1))
    return y.reshape(N, Cout, 2 * H, 2 * W)


if __name__ == "__main__":
    key = jax.random.PRNGKey(0)
    k_x, k_w, k_b = jax.random.split(key, 3)

    N, Cin, Cout, H, W = 2, 4, 4, 16, 16
    x = jax.random.normal(k_x, (N, Cin, H, W), dtype=jnp.float32)

    # Deterministic params (mimic PyTorch uniform(-bound, bound) init).
    bound = 1.0 / jnp.sqrt(Cin * 3 * 3)
    weight = jax.random.uniform(k_w, (Cin, Cout, 3, 3), jnp.float32, -bound, bound)
    bias = jax.random.uniform(k_b, (Cout,), jnp.float32, -bound, bound)

    out = up_forward(x, weight, bias)
    out = jax.block_until_ready(out)

    # Reference: transposed conv = lhs-dilated conv with the flipped kernel, then ReLU.
    w_oihw = jnp.transpose(weight[:, :, ::-1, ::-1], (1, 0, 2, 3))
    ref = jax.lax.conv_general_dilated(
        x, w_oihw, window_strides=(1, 1), padding=((1, 2), (1, 2)),
        lhs_dilation=(2, 2), dimension_numbers=("NCHW", "OIHW", "NCHW"),
        precision=jax.lax.Precision.HIGHEST,
    ) + bias[None, :, None, None]
    ref = jnp.maximum(ref, 0.0)

    assert out.shape == (N, Cout, 2 * H, 2 * W)
    assert jnp.allclose(out, ref, atol=1e-5, rtol=1e-5)

    print("KERNEL_OK")
</pallas_src>

<mosaic_0001>
module attributes {stable_mosaic.version = 11 : i64} {
  func.func @_up_kernel(%arg0: i32, %arg1: memref<4x512xf32, #tpu.memory_space<vmem>>, %arg2: memref<16x16xf32, #tpu.memory_space<vmem>>, %arg3: memref<16x1xf32, #tpu.memory_space<vmem>>, %arg4: memref<16x512xf32, #tpu.memory_space<vmem>>, %arg5: memref<16x512xf32, #tpu.memory_space<vmem>>) attributes {dimension_semantics = [#tpu.dimension_semantics<parallel>], iteration_bounds = array<i64: 1>, scalar_prefetch = 0 : i64, scratch_operands = 1 : i64, tpu.core_type = #tpu.core_type<tc>, window_params = [{transform_indices = @transform_0, window_bounds = array<i64: 4, 512>}, {pipeline_mode = #tpu.pipeline_mode<synchronous>, transform_indices = @transform_1, window_bounds = array<i64: 16, 16>}, {pipeline_mode = #tpu.pipeline_mode<synchronous>, transform_indices = @transform_2, window_bounds = array<i64: 16, 1>}, {transform_indices = @transform_3, window_bounds = array<i64: 16, 512>}]} {
    %c0 = arith.constant 0 : index
    %c0_0 = arith.constant 0 : index
    %0 = vector.load %arg1[%c0, %c0_0] : memref<4x512xf32, #tpu.memory_space<vmem>>, vector<4x512xf32>
    %1 = tpu.iota {dimensions = array<i32: 1>} : vector<1x512xi32>
    %c16_i32 = arith.constant 16 : i32
    %c0_i32 = arith.constant 0 : i32
    %2 = arith.cmpi eq, %c16_i32, %c0_i32 : i32
    %c1_i32 = arith.constant 1 : i32
    %3 = arith.select %2, %c1_i32, %c16_i32 : i32
    %4 = vector.broadcast %3 : i32 to vector<1x512xi32>
    %5 = arith.remsi %1, %4 : vector<1x512xi32>
    %c0_i32_1 = arith.constant 0 : i32
    %6 = vector.broadcast %c0_i32_1 : i32 to vector<1x512xi32>
    %7 = arith.cmpi ne, %5, %6 : vector<1x512xi32>
    %c0_i32_2 = arith.constant 0 : i32
    %8 = vector.broadcast %c0_i32_2 : i32 to vector<1x512xi32>
    %9 = arith.cmpi slt, %5, %8 : vector<1x512xi32>
    %c0_i32_3 = arith.constant 0 : i32
    %10 = arith.cmpi slt, %3, %c0_i32_3 : i32
    %11 = vector.broadcast %10 : i1 to vector<1x512xi1>
    %12 = vector.broadcast %11 : vector<1x512xi1> to vector<1x512xi1>
    %13 = arith.xori %9, %12 : vector<1x512xi1>
    %14 = arith.andi %13, %7 : vector<1x512xi1>
    %15 = vector.broadcast %3 : i32 to vector<1x512xi32>
    %16 = arith.addi %5, %15 : vector<1x512xi32>
    %17 = arith.select %14, %16, %5 : vector<1x512xi1>, vector<1x512xi32>
    %c15_i32 = arith.constant 15 : i32
    %18 = vector.broadcast %c15_i32 : i32 to vector<1x512xi32>
    %19 = arith.cmpi ne, %17, %18 : vector<1x512xi32>
    %c256_i32 = arith.constant 256 : i32
    %c0_i32_4 = arith.constant 0 : i32
    %20 = arith.cmpi eq, %c256_i32, %c0_i32_4 : i32
    %c1_i32_5 = arith.constant 1 : i32
    %21 = arith.select %20, %c1_i32_5, %c256_i32 : i32
    %22 = vector.broadcast %21 : i32 to vector<1x512xi32>
    %23 = arith.remsi %1, %22 : vector<1x512xi32>
    %c0_i32_6 = arith.constant 0 : i32
    %24 = vector.broadcast %c0_i32_6 : i32 to vector<1x512xi32>
    %25 = arith.cmpi ne, %23, %24 : vector<1x512xi32>
    %c0_i32_7 = arith.constant 0 : i32
    %26 = vector.broadcast %c0_i32_7 : i32 to vector<1x512xi32>
    %27 = arith.cmpi slt, %23, %26 : vector<1x512xi32>
    %c0_i32_8 = arith.constant 0 : i32
    %28 = arith.cmpi slt, %21, %c0_i32_8 : i32
    %29 = vector.broadcast %28 : i1 to vector<1x512xi1>
    %30 = vector.broadcast %29 : vector<1x512xi1> to vector<1x512xi1>
    %31 = arith.xori %27, %30 : vector<1x512xi1>
    %32 = arith.andi %31, %25 : vector<1x512xi1>
    %33 = vector.broadcast %21 : i32 to vector<1x512xi32>
    %34 = arith.addi %23, %33 : vector<1x512xi32>
    %35 = arith.select %32, %34, %23 : vector<1x512xi1>, vector<1x512xi32>
    %c240_i32 = arith.constant 240 : i32
    %36 = vector.broadcast %c240_i32 : i32 to vector<1x512xi32>
    %37 = arith.cmpi slt, %35, %36 : vector<1x512xi32>
    %c0_9 = arith.constant 0 : index
    %c0_10 = arith.constant 0 : index
    %38 = vector.load %arg5[%c0_9, %c0_10] : memref<16x512xf32, #tpu.memory_space<vmem>>, vector<4x512xf32>
    tpu.vector_store %arg5[%c0_9, %c0_10], %0 {strides = array<i32>} : memref<16x512xf32, #tpu.memory_space<vmem>>, vector<4x512xf32>,
    %c511_i32 = arith.constant 511 : i32
    %39 = tpu.dynamic_rotate %0 by %c511_i32 dim 1 : vector<4x512xf32>, i32 -> vector<4x512xf32>
    %cst = arith.constant 0.000000e+00 : f32
    %40 = vector.shape_cast %19 : vector<1x512xi1> to vector<1x512xi1>
    %41 = vector.broadcast %40 : vector<1x512xi1> to vector<4x512xi1>
    %42 = vector.broadcast %cst : f32 to vector<4x512xf32>
    %43 = arith.select %41, %39, %42 : vector<4x512xi1>, vector<4x512xf32>
    %c4 = arith.constant 4 : index
    %c0_11 = arith.constant 0 : index
    %44 = vector.load %arg5[%c4, %c0_11] : memref<16x512xf32, #tpu.memory_space<vmem>>, vector<4x512xf32>
    tpu.vector_store %arg5[%c4, %c0_11], %43 {strides = array<i32>} : memref<16x512xf32, #tpu.memory_space<vmem>>, vector<4x512xf32>,
    %c496_i32 = arith.constant 496 : i32
    %45 = tpu.dynamic_rotate %0 by %c496_i32 dim 1 : vector<4x512xf32>, i32 -> vector<4x512xf32>
    %cst_12 = arith.constant 0.000000e+00 : f32
    %46 = vector.shape_cast %37 : vector<1x512xi1> to vector<1x512xi1>
    %47 = vector.broadcast %46 : vector<1x512xi1> to vector<4x512xi1>
    %48 = vector.broadcast %cst_12 : f32 to vector<4x512xf32>
    %49 = arith.select %47, %45, %48 : vector<4x512xi1>, vector<4x512xf32>
    %c8 = arith.constant 8 : index
    %c0_13 = arith.constant 0 : index
    %50 = vector.load %arg5[%c8, %c0_13] : memref<16x512xf32, #tpu.memory_space<vmem>>, vector<4x512xf32>
    tpu.vector_store %arg5[%c8, %c0_13], %49 {strides = array<i32>} : memref<16x512xf32, #tpu.memory_space<vmem>>, vector<4x512xf32>,
    %51 = arith.andi %19, %37 : vector<1x512xi1>
    %c495_i32 = arith.constant 495 : i32
    %52 = tpu.dynamic_rotate %0 by %c495_i32 dim 1 : vector<4x512xf32>, i32 -> vector<4x512xf32>
    %cst_14 = arith.constant 0.000000e+00 : f32
    %53 = vector.shape_cast %51 : vector<1x512xi1> to vector<1x512xi1>
    %54 = vector.broadcast %53 : vector<1x512xi1> to vector<4x512xi1>
    %55 = vector.broadcast %cst_14 : f32 to vector<4x512xf32>
    %56 = arith.select %54, %52, %55 : vector<4x512xi1>, vector<4x512xf32>
    %c12 = arith.constant 12 : index
    %c0_15 = arith.constant 0 : index
    %57 = vector.load %arg5[%c12, %c0_15] : memref<16x512xf32, #tpu.memory_space<vmem>>, vector<4x512xf32>
    tpu.vector_store %arg5[%c12, %c0_15], %56 {strides = array<i32>} : memref<16x512xf32, #tpu.memory_space<vmem>>, vector<4x512xf32>,
    %c0_16 = arith.constant 0 : index
    %c0_17 = arith.constant 0 : index
    %58 = vector.load %arg2[%c0_16, %c0_17] : memref<16x16xf32, #tpu.memory_space<vmem>>, vector<16x16xf32>
    %c0_18 = arith.constant 0 : index
    %c0_19 = arith.constant 0 : index
    %59 = vector.load %arg5[%c0_18, %c0_19] : memref<16x512xf32, #tpu.memory_space<vmem>>, vector<16x512xf32>
    %cst_20 = arith.constant dense<0.000000e+00> : vector<16x512xf32>
    %60 = tpu.matmul %58, %59, %cst_20 {dimension_numbers = #tpu.dot_dimension_numbers<[1], [0], [0], [1], [0, 0, 1, 1], [], []>} : vector<16x16xf32>, vector<16x512xf32>, vector<16x512xf32> -> vector<16x512xf32>
    %c0_21 = arith.constant 0 : index
    %c0_22 = arith.constant 0 : index
    %61 = vector.load %arg3[%c0_21, %c0_22] : memref<16x1xf32, #tpu.memory_space<vmem>>, vector<16x1xf32>
    %62 = vector.broadcast %61 : vector<16x1xf32> to vector<16x512xf32>
    %63 = arith.addf %60, %62 : vector<16x512xf32>
    %cst_23 = arith.constant 0.000000e+00 : f32
    %64 = vector.broadcast %cst_23 : f32 to vector<16x512xf32>
    %65 = arith.maximumf %63, %64 : vector<16x512xf32>
    %c0_24 = arith.constant 0 : index
    %c0_25 = arith.constant 0 : index
    %66 = vector.load %arg4[%c0_24, %c0_25] : memref<16x512xf32, #tpu.memory_space<vmem>>, vector<16x512xf32>
    tpu.vector_store %arg4[%c0_24, %c0_25], %65 {strides = array<i32>} : memref<16x512xf32, #tpu.memory_space<vmem>>, vector<16x512xf32>,
    return
  }
  func.func @transform_0(%arg0: i32) -> (i32, i32) {
    %c0_i32 = arith.constant 0 : i32
    %c0_i32_0 = arith.constant 0 : i32
    return %c0_i32, %arg0 : i32, i32
  }
  func.func @transform_1(%arg0: i32) -> (i32, i32) {
    %c0_i32 = arith.constant 0 : i32
    %c0_i32_0 = arith.constant 0 : i32
    %c0_i32_1 = arith.constant 0 : i32
    return %c0_i32, %c0_i32_0 : i32, i32
  }
  func.func @transform_2(%arg0: i32) -> (i32, i32) {
    %c0_i32 = arith.constant 0 : i32
    %c0_i32_0 = arith.constant 0 : i32
    %c0_i32_1 = arith.constant 0 : i32
    return %c0_i32, %c0_i32_0 : i32, i32
  }
  func.func @transform_3(%arg0: i32) -> (i32, i32) {
    %c0_i32 = arith.constant 0 : i32
    %c0_i32_0 = arith.constant 0 : i32
    return %c0_i32, %arg0 : i32, i32
  }
}

</mosaic_0001>

<llo_original>
// kernel: tpu_custom_call.1
$region0: #{tpu_custom_call.1}
  #allocation0 [shape = 'u32[]', space=smem, size = 0x4, offset = 0x4, fixed_abs, tag = 'smem constant byte address 0x4 - core index']
  #allocation1 [shape = 'u32[144,128]{1,0:T(1,128)}', space=vmem, size = 0x12000, scoped, tag = 'internal scratch']
  #allocation2 [shape = 'f32[16,512]{1,0:T(8,128)}', space=vmem, size = 0x8000, scoped, tag = 'scratch operand']
  %s0 = inlined_call_operand.vmem [shape: f32[4,512], index: 0, kind: input, shape index: {}]
  %s1 = inlined_call_operand.hbm [shape: f32[16,16], index: 1, kind: input, shape index: {}]
  %s2 = inlined_call_operand.vmem [shape: f32[16,1], index: 2, kind: input, shape index: {}]
  %s3 = inlined_call_operand.hbm [shape: f32[16,512], index: 3, kind: output, shape index: {}]
  %s4 = sld [smem:[#allocation0]]
  $region26: #{tpu_custom_call.1} parent=0
    _
  %s6 = ssub.s32 1, %s4
  %s7 = scalar_select 0, %s6, %s4
  $region1: #{tpu_custom_call.1} parent=0
    #allocation3 [shape = 'u8[8192]{0}', space=vmem, size = 0x2000, scoped, tag = 'input window, operand 1, single buffered']
    #allocation4 [shape = 's32[1]{0}', space=sflag, size = 0x4, scoped, tag = 'scoped memory for tpu_custom_call.1']
    #allocation5 [shape = 's32[1]{0}', space=sflag, size = 0x4, scoped, tag = 'scoped memory for tpu_custom_call.1']
    #allocation6 [shape = 'u8[32768]{0}', space=vmem, size = 0x8000, scoped, tag = 'output window, operand 0, single buffered']
    %8 = vsyncpa [#allocation4], 0
    %9 = vsyncpa [#allocation5], 0
    // Predicated region
    $region2: #{tpu_custom_call.1} parent=1 // pred_check
      _
    $region3: #{tpu_custom_call.1} parent=1 // pred_check_branch
      %11 = sbr.rel (0) target = $region5
    $region4: #{tpu_custom_call.1} parent=1 // pred_region
      _
    $region5: #{tpu_custom_call.1} parent=1 // pred_fallthru
      _
    // Predicated region
    $region6: #{tpu_custom_call.1} parent=1 // pred_check
      _
    $region7: #{tpu_custom_call.1} parent=1 // pred_check_branch
      %13 = sbr.rel (0) target = $region9
    $region8: #{tpu_custom_call.1} parent=1 // pred_region
      %s15 = ssub.s32 256, 256
      %16 = vsyncadd [#allocation4], %s15
      %s17 = sshll.u32 [#allocation3], 4
      %s18 = int_to_ptr.vmem [resolvable:$true] %s17
      %23 = dma.hbm_to_vmem [thread:$0]  %s1, 256, %s18, [#allocation4], 128, 128, 8
    $region9: #{tpu_custom_call.1} parent=1 // pred_fallthru
      _
    // Predicated region
    $region10: #{tpu_custom_call.1} parent=1 // pred_check
      _
    $region11: #{tpu_custom_call.1} parent=1 // pred_check_branch
      %25 = sbr.rel (0) target = $region13
    $region12: #{tpu_custom_call.1} parent=1 // pred_region
      _
    $region13: #{tpu_custom_call.1} parent=1 // pred_fallthru
      _
    // Predicated region
    $region14: #{tpu_custom_call.1} parent=1 // pred_check
      _
    $region15: #{tpu_custom_call.1} parent=1 // pred_check_branch
      %27 = sbr.rel (0) target = $region17
    $region16: #{tpu_custom_call.1} parent=1 // pred_region
      %28 = dma.done [#allocation4], 256
    $region17: #{tpu_custom_call.1} parent=1 // pred_fallthru
      _
    %v29 = vld [vmem:[%s0] sm:$0xff]
    %v30 = vld [vmem:[%s0 + $0x8] sm:$0xff]
    %v31 = vlaneseq
    %v32 = vand.u32 %v31, 127
    %v33 = vadd.s32 %v32, 128
    %v34 = vadd.s32 %v32, 256
    %v35 = vadd.s32 %v32, 384
    %vm36 = vcmp.lt.s32.totalorder %v32, 0
    %v37 = vsub.s32 0, %v32
    %v38 = vsel %vm36, %v37, %v32
    %v39 = vshrl.u32 %v38, 4
    %v40 = vand.u32 %v38, 15
    %v41 = vsub.s32 0, %v40
    %v42 = vsel %vm36, %v41, %v40
    %vm43 = vcmp.lt.s32.totalorder %v33, 0
    %v44 = vsub.s32 0, %v33
    %v45 = vsel %vm43, %v44, %v33
    %v46 = vshrl.u32 %v45, 4
    %v47 = vand.u32 %v45, 15
    %v48 = vsub.s32 0, %v47
    %v49 = vsel %vm43, %v48, %v47
    %vm50 = vcmp.lt.s32.totalorder %v34, 0
    %v51 = vsub.s32 0, %v34
    %v52 = vsel %vm50, %v51, %v34
    %v53 = vshrl.u32 %v52, 4
    %v54 = vand.u32 %v52, 15
    %v55 = vsub.s32 0, %v54
    %v56 = vsel %vm50, %v55, %v54
    %vm57 = vcmp.lt.s32.totalorder %v35, 0
    %v58 = vsub.s32 0, %v35
    %v59 = vsel %vm57, %v58, %v35
    %v60 = vshrl.u32 %v59, 4
    %v61 = vand.u32 %v59, 15
    %v62 = vsub.s32 0, %v61
    %v63 = vsel %vm57, %v62, %v61
    %vm64 = vcmp.ne.s32.totalorder %v42, 0
    %vm65 = vcmp.ne.s32.totalorder %v49, 0
    %vm66 = vcmp.ne.s32.totalorder %v56, 0
    %vm67 = vcmp.ne.s32.totalorder %v63, 0
    %vm68 = vcmp.lt.s32.totalorder %v42, 0
    %vm69 = vcmp.lt.s32.totalorder %v49, 0
    %vm70 = vcmp.lt.s32.totalorder %v56, 0
    %vm71 = vcmp.lt.s32.totalorder %v63, 0
    %vm72 = vmand %vm68, %vm64
    %vm73 = vmand %vm69, %vm65
    %vm74 = vmand %vm70, %vm66
    %vm75 = vmand %vm71, %vm67
    %v76 = vadd.s32 %v42, 16
    %v77 = vadd.s32 %v49, 16
    %v78 = vadd.s32 %v56, 16
    %v79 = vadd.s32 %v63, 16
    %v80 = vsel %vm72, %v76, %v42
    %v81 = vsel %vm73, %v77, %v49
    %v82 = vsel %vm74, %v78, %v56
    %v83 = vsel %vm75, %v79, %v63
    %vm84 = vcmp.ne.s32.totalorder %v80, 15
    %vm85 = vcmp.ne.s32.totalorder %v81, 15
    %vm86 = vcmp.ne.s32.totalorder %v82, 15
    %vm87 = vcmp.ne.s32.totalorder %v83, 15
    %vm88 = vcmp.lt.s32.totalorder %v32, 0
    %v89 = vsub.s32 0, %v32
    %v90 = vsel %vm88, %v89, %v32
    %v91 = vshrl.u32 %v90, 8
    %v92 = vand.u32 %v90, 255
    %v93 = vsub.s32 0, %v92
    %v94 = vsel %vm88, %v93, %v92
    %vm95 = vcmp.lt.s32.totalorder %v33, 0
    %v96 = vsub.s32 0, %v33
    %v97 = vsel %vm95, %v96, %v33
    %v98 = vshrl.u32 %v97, 8
    %v99 = vand.u32 %v97, 255
    %v100 = vsub.s32 0, %v99
    %v101 = vsel %vm95, %v100, %v99
    %vm102 = vcmp.lt.s32.totalorder %v34, 0
    %v103 = vsub.s32 0, %v34
    %v104 = vsel %vm102, %v103, %v34
    %v105 = vshrl.u32 %v104, 8
    %v106 = vand.u32 %v104, 255
    %v107 = vsub.s32 0, %v106
    %v108 = vsel %vm102, %v107, %v106
    %vm109 = vcmp.lt.s32.totalorder %v35, 0
    %v110 = vsub.s32 0, %v35
    %v111 = vsel %vm109, %v110, %v35
    %v112 = vshrl.u32 %v111, 8
    %v113 = vand.u32 %v111, 255
    %v114 = vsub.s32 0, %v113
    %v115 = vsel %vm109, %v114, %v113
    %vm116 = vcmp.ne.s32.totalorder %v94, 0
    %vm117 = vcmp.ne.s32.totalorder %v101, 0
    %vm118 = vcmp.ne.s32.totalorder %v108, 0
    %vm119 = vcmp.ne.s32.totalorder %v115, 0
    %vm120 = vcmp.lt.s32.totalorder %v94, 0
    %vm121 = vcmp.lt.s32.totalorder %v101, 0
    %vm122 = vcmp.lt.s32.totalorder %v108, 0
    %vm123 = vcmp.lt.s32.totalorder %v115, 0
    %vm124 = vmand %vm120, %vm116
    %vm125 = vmand %vm121, %vm117
    %vm126 = vmand %vm122, %vm118
    %vm127 = vmand %vm123, %vm119
    %v128 = vadd.s32 %v94, 256
    %v129 = vadd.s32 %v101, 256
    %v130 = vadd.s32 %v108, 256
    %v131 = vadd.s32 %v115, 256
    %v132 = vsel %vm124, %v128, %v94
    %v133 = vsel %vm125, %v129, %v101
    %v134 = vsel %vm126, %v130, %v108
    %v135 = vsel %vm127, %v131, %v115
    %vm136 = vcmp.lt.s32.totalorder %v132, 240
    %vm137 = vcmp.lt.s32.totalorder %v133, 240
    %vm138 = vcmp.lt.s32.totalorder %v134, 240
    %vm139 = vcmp.lt.s32.totalorder %v135, 240
    %v142 = vcombine.high %v29, %v29
    %v143 = vcombine.high %v30, %v30
    %146 = vst [vmem:[#allocation2] sm:$0xf] %v29
    %147 = vst [vmem:[#allocation2 + $0x8] sm:$0xf] %v142
    %148 = vst [vmem:[#allocation2 + $0x10] sm:$0xf] %v30
    %149 = vst [vmem:[#allocation2 + $0x18] sm:$0xf] %v143
    %150 = vrot.lane.b32.xlu0 %v29, 127
    %v151 = vpop.permute.xlu0 %150
    %152 = vrot.lane.b32.xlu0 %v142, 127
    %v153 = vpop.permute.xlu0 %152
    %154 = vrot.lane.b32.xlu0 %v30, 127
    %v155 = vpop.permute.xlu0 %154
    %156 = vrot.lane.b32.xlu0 %v143, 127
    %v157 = vpop.permute.xlu0 %156
    %vm158 = vcmp.lt.s32.totalorder %v32, 127
    %v159 = vsel %vm158, %v155, %v157
    %v160 = vsel %vm158, %v153, %v155
    %v161 = vsel %vm158, %v151, %v153
    %v162 = vsel %vm158, %v157, %v151
    %v163 = vsel %vm84, 1, 0
    %v164 = vsel %vm85, 1, 0
    %v165 = vsel %vm86, 1, 0
    %v166 = vsel %vm87, 1, 0
    %vm167 = vcmp.eq.s32.totalorder %v163, 1
    %vm168 = vcmp.eq.s32.totalorder %v164, 1
    %vm169 = vcmp.eq.s32.totalorder %v165, 1
    %vm170 = vcmp.eq.s32.totalorder %v166, 1
    %v171 = vsel %vm167, %v161, 0.0
    %v172 = vsel %vm168, %v160, 0.0
    %v173 = vsel %vm169, %v159, 0.0
    %v174 = vsel %vm170, %v162, 0.0
    %v179 = vrot.slane %v171, 4
    %v180 = vrot.slane %v172, 4
    %v181 = vrot.slane %v173, 4
    %v182 = vrot.slane %v174, 4
    %187 = vst [vmem:[#allocation2] sm:$0xf0] %v179
    %188 = vst [vmem:[#allocation2 + $0x8] sm:$0xf0] %v180
    %189 = vst [vmem:[#allocation2 + $0x10] sm:$0xf0] %v181
    %190 = vst [vmem:[#allocation2 + $0x18] sm:$0xf0] %v182
    %191 = vrot.lane.b32.xlu0 %v29, 112
    %v192 = vpop.permute.xlu0 %191
    %193 = vrot.lane.b32.xlu0 %v142, 112
    %v194 = vpop.permute.xlu0 %193
    %195 = vrot.lane.b32.xlu0 %v30, 112
    %v196 = vpop.permute.xlu0 %195
    %197 = vrot.lane.b32.xlu0 %v143, 112
    %v198 = vpop.permute.xlu0 %197
    %vm199 = vcmp.lt.s32.totalorder %v32, 112
    %v200 = vsel %vm199, %v196, %v198
    %v201 = vsel %vm199, %v194, %v196
    %v202 = vsel %vm199, %v192, %v194
    %v203 = vsel %vm199, %v198, %v192
    %v204 = vsel %vm136, 1, 0
    %v205 = vsel %vm137, 1, 0
    %v206 = vsel %vm138, 1, 0
    %v207 = vsel %vm139, 1, 0
    %vm208 = vcmp.eq.s32.totalorder %v204, 1
    %vm209 = vcmp.eq.s32.totalorder %v205, 1
    %vm210 = vcmp.eq.s32.totalorder %v206, 1
    %vm211 = vcmp.eq.s32.totalorder %v207, 1
    %v212 = vsel %vm208, %v202, 0.0
    %v213 = vsel %vm209, %v201, 0.0
    %v214 = vsel %vm210, %v200, 0.0
    %v215 = vsel %vm211, %v203, 0.0
    %216 = vst [vmem:[#allocation2 + $0x20] sm:$0xf] %v212
    %217 = vst [vmem:[#allocation2 + $0x28] sm:$0xf] %v213
    %218 = vst [vmem:[#allocation2 + $0x30] sm:$0xf] %v214
    %219 = vst [vmem:[#allocation2 + $0x38] sm:$0xf] %v215
    %vm220 = vmand %vm84, %vm136
    %vm221 = vmand %vm85, %vm137
    %vm222 = vmand %vm86, %vm138
    %vm223 = vmand %vm87, %vm139
    %224 = vrot.lane.b32.xlu0 %v29, 111
    %v225 = vpop.permute.xlu0 %224
    %226 = vrot.lane.b32.xlu0 %v142, 111
    %v227 = vpop.permute.xlu0 %226
    %228 = vrot.lane.b32.xlu0 %v30, 111
    %v229 = vpop.permute.xlu0 %228
    %230 = vrot.lane.b32.xlu0 %v143, 111
    %v231 = vpop.permute.xlu0 %230
    %vm232 = vcmp.lt.s32.totalorder %v32, 111
    %v233 = vsel %vm232, %v229, %v231
    %v234 = vsel %vm232, %v227, %v229
    %v235 = vsel %vm232, %v225, %v227
    %v236 = vsel %vm232, %v231, %v225
    %v237 = vsel %vm220, 1, 0
    %v238 = vsel %vm221, 1, 0
    %v239 = vsel %vm222, 1, 0
    %v240 = vsel %vm223, 1, 0
    %vm241 = vcmp.eq.s32.totalorder %v237, 1
    %vm242 = vcmp.eq.s32.totalorder %v238, 1
    %vm243 = vcmp.eq.s32.totalorder %v239, 1
    %vm244 = vcmp.eq.s32.totalorder %v240, 1
    %v245 = vsel %vm241, %v235, 0.0
    %v246 = vsel %vm242, %v234, 0.0
    %v247 = vsel %vm243, %v233, 0.0
    %v248 = vsel %vm244, %v236, 0.0
    %v253 = vrot.slane %v245, 4
    %v254 = vrot.slane %v246, 4
    %v255 = vrot.slane %v247, 4
    %v256 = vrot.slane %v248, 4
    %261 = vst [vmem:[#allocation2 + $0x20] sm:$0xf0] %v253
    %262 = vst [vmem:[#allocation2 + $0x28] sm:$0xf0] %v254
    %263 = vst [vmem:[#allocation2 + $0x30] sm:$0xf0] %v255
    %264 = vst [vmem:[#allocation2 + $0x38] sm:$0xf0] %v256
    %v265 = vld [vmem:[#allocation3] sm:$0xff]
    %v266 = vld [vmem:[#allocation3 + $0x8] sm:$0xff]
    %v267 = vld [vmem:[#allocation2] sm:$0xff]
    %v268 = vld [vmem:[#allocation2 + $0x8] sm:$0xff]
    %v269 = vld [vmem:[#allocation2 + $0x10] sm:$0xff]
    %v270 = vld [vmem:[#allocation2 + $0x18] sm:$0xff]
    %v271 = vld [vmem:[#allocation2 + $0x20] sm:$0xff]
    %v272 = vld [vmem:[#allocation2 + $0x28] sm:$0xff]
    %v273 = vld [vmem:[#allocation2 + $0x30] sm:$0xff]
    %v274 = vld [vmem:[#allocation2 + $0x38] sm:$0xff]
    %v275 = vld [vmem:[%s2] sm:$0xff]
    %v276 = vld [vmem:[%s2 + $0x8] sm:$0xff]
    %278 = vset.pattern.permute.xlu0 0
    %279 = vperm.xlu0 %278, %v275
    %v280 = vpop.permute.xlu0 %279
    %283 = vset.pattern.permute.xlu0 0
    %284 = vperm.xlu0 %283, %v276
    %v285 = vpop.permute.xlu0 %284
    %vm287 = vcmask 130048
    %v289 = vsel %vm287, %v265, 0
    %v292 = vsel %vm287, %v266, 0
    %294 = vmatprep.subr.mxu0 0.0
    %295 = vmatpush1.msra.mxu0 0.0
    %296 = vmatprep.subr.mxu0 0.0
    %297 = vmatpush1.msra.mxu0 0.0
    %298 = vmatprep.subr.mxu0 0.0
    %299 = vmatpush1.msra.mxu0 0.0
    %300 = vmatprep.subr.mxu0 0.0
    %301 = vmatpush1.msra.mxu0 0.0
    %302 = vmatprep.subr.mxu0 0.0
    %303 = vmatpush1.msra.mxu0 0.0
    %304 = vmatprep.subr.mxu0 0.0
    %305 = vmatpush1.msra.mxu0 0.0
    %306 = vmatprep.subr.mxu0 0.0
    %307 = vmatpush1.msra.mxu0 0.0
    %308 = vmatprep.subr.mxu0 0.0
    %309 = vmatpush1.msra.mxu0 0.0
    %310 = vmatprep.subr.mxu0 0.0
    %311 = vmatpush1.msra.mxu0 0.0
    %312 = vmatprep.subr.mxu0 0.0
    %313 = vmatpush1.msra.mxu0 0.0
    %314 = vmatprep.subr.mxu0 0.0
    %315 = vmatpush1.msra.mxu0 0.0
    %316 = vmatprep.subr.mxu0 0.0
    %317 = vmatpush1.msra.mxu0 0.0
    %318 = vmatprep.subr.mxu0 0.0
    %319 = vmatpush1.msra.mxu0 0.0
    %320 = vmatprep.subr.mxu0 0.0
    %321 = vmatpush1.msra.mxu0 0.0
    %322 = vmatprep.subr.mxu0 %v272
    %323 = vmatpush1.msra.mxu0 %v271
    %324 = vmatprep.subr.mxu0 %v268
    %325 = vmatpush1.msra.mxu0 %v267
    %326 = vmatprep.subr.mxu0 0.0
    %327 = vmatpush2.msra.mxu0 0.0
    %328 = vmatprep.subr.mxu0 0.0
    %329 = vmatpush2.msra.mxu0 0.0
    %330 = vmatprep.subr.mxu0 0.0
    %331 = vmatpush2.msra.mxu0 0.0
    %332 = vmatprep.subr.mxu0 0.0
    %333 = vmatpush2.msra.mxu0 0.0
    %334 = vmatprep.subr.mxu0 0.0
    %335 = vmatpush2.msra.mxu0 0.0
    %336 = vmatprep.subr.mxu0 0.0
    %337 = vmatpush2.msra.mxu0 0.0
    %338 = vmatprep.subr.mxu0 0.0
    %339 = vmatpush2.msra.mxu0 0.0
    %340 = vmatprep.subr.mxu0 0.0
    %341 = vmatpush2.msra.mxu0 0.0
    %342 = vmatprep.subr.mxu0 0.0
    %343 = vmatpush2.msra.mxu0 0.0
    %344 = vmatprep.subr.mxu0 0.0
    %345 = vmatpush2.msra.mxu0 0.0
    %346 = vmatprep.subr.mxu0 0.0
    %347 = vmatpush2.msra.mxu0 0.0
    %348 = vmatprep.subr.mxu0 0.0
    %349 = vmatpush2.msra.mxu0 0.0
    %350 = vmatprep.subr.mxu0 0.0
    %351 = vmatpush2.msra.mxu0 0.0
    %352 = vmatprep.subr.mxu0 0.0
    %353 = vmatpush2.msra.mxu0 0.0
    %354 = vmatprep.subr.mxu0 0.0
    %355 = vmatpush2.msra.mxu0 0.0
    %356 = vmatprep.subr.mxu0 0.0
    %357 = vmatpush2.msra.mxu0 0.0
    %358 = vmatprep.mubr.f32.mxu0 0.0
    %359 = vmatmul.mubr.f32.gmra.mxu0 %v289
    %v360 = vpop.f32.mrf.mxu0
    %v361 = vadd.f32 %v280, %v360
    %v362 = vpop.f32.mrf.mxu0
    %v363 = vadd.f32 %v280, %v362
    %364 = vmatprep.mubr.f32.mxu0 0.0
    %365 = vmatmul.mubr.f32.gmra.mxu0 %v292
    %v366 = vpop.f32.mrf.mxu0
    %v367 = vadd.f32 %v285, %v366
    %v368 = vpop.f32.mrf.mxu0
    %v369 = vadd.f32 %v285, %v368
    %370 = vdwg.mxu0
    %371 = vmatprep.subr.mxu0 0.0
    %372 = vmatpush1.msra.mxu0 0.0
    %373 = vmatprep.subr.mxu0 0.0
    %374 = vmatpush1.msra.mxu0 0.0
    %375 = vmatprep.subr.mxu0 0.0
    %376 = vmatpush1.msra.mxu0 0.0
    %377 = vmatprep.subr.mxu0 0.0
    %378 = vmatpush1.msra.mxu0 0.0
    %379 = vmatprep.subr.mxu0 0.0
    %380 = vmatpush1.msra.mxu0 0.0
    %381 = vmatprep.subr.mxu0 0.0
    %382 = vmatpush1.msra.mxu0 0.0
    %383 = vmatprep.subr.mxu0 0.0
    %384 = vmatpush1.msra.mxu0 0.0
    %385 = vmatprep.subr.mxu0 0.0
    %386 = vmatpush1.msra.mxu0 0.0
    %387 = vmatprep.subr.mxu0 0.0
    %388 = vmatpush1.msra.mxu0 0.0
    %389 = vmatprep.subr.mxu0 0.0
    %390 = vmatpush1.msra.mxu0 0.0
    %391 = vmatprep.subr.mxu0 0.0
    %392 = vmatpush1.msra.mxu0 0.0
    %393 = vmatprep.subr.mxu0 0.0
    %394 = vmatpush1.msra.mxu0 0.0
    %395 = vmatprep.subr.mxu0 0.0
    %396 = vmatpush1.msra.mxu0 0.0
    %397 = vmatprep.subr.mxu0 0.0
    %398 = vmatpush1.msra.mxu0 0.0
    %399 = vmatprep.subr.mxu0 %v274
    %400 = vmatpush1.msra.mxu0 %v273
    %401 = vmatprep.subr.mxu0 %v270
    %402 = vmatpush1.msra.mxu0 %v269
    %403 = vmatprep.subr.mxu0 0.0
    %404 = vmatpush2.msra.mxu0 0.0
    %405 = vmatprep.subr.mxu0 0.0
    %406 = vmatpush2.msra.mxu0 0.0
    %407 = vmatprep.subr.mxu0 0.0
    %408 = vmatpush2.msra.mxu0 0.0
    %409 = vmatprep.subr.mxu0 0.0
    %410 = vmatpush2.msra.mxu0 0.0
    %411 = vmatprep.subr.mxu0 0.0
    %412 = vmatpush2.msra.mxu0 0.0
    %413 = vmatprep.subr.mxu0 0.0
    %414 = vmatpush2.msra.mxu0 0.0
    %415 = vmatprep.subr.mxu0 0.0
    %416 = vmatpush2.msra.mxu0 0.0
    %417 = vmatprep.subr.mxu0 0.0
    %418 = vmatpush2.msra.mxu0 0.0
    %419 = vmatprep.subr.mxu0 0.0
    %420 = vmatpush2.msra.mxu0 0.0
    %421 = vmatprep.subr.mxu0 0.0
    %422 = vmatpush2.msra.mxu0 0.0
    %423 = vmatprep.subr.mxu0 0.0
    %424 = vmatpush2.msra.mxu0 0.0
    %425 = vmatprep.subr.mxu0 0.0
    %426 = vmatpush2.msra.mxu0 0.0
    %427 = vmatprep.subr.mxu0 0.0
    %428 = vmatpush2.msra.mxu0 0.0
    %429 = vmatprep.subr.mxu0 0.0
    %430 = vmatpush2.msra.mxu0 0.0
    %431 = vmatprep.subr.mxu0 0.0
    %432 = vmatpush2.msra.mxu0 0.0
    %433 = vmatprep.subr.mxu0 0.0
    %434 = vmatpush2.msra.mxu0 0.0
    %435 = vmatprep.mubr.f32.mxu0 0.0
    %436 = vmatmul.mubr.f32.gmra.mxu0 %v289
    %v437 = vpop.f32.mrf.mxu0
    %v438 = vadd.f32 %v280, %v437
    %v439 = vpop.f32.mrf.mxu0
    %v440 = vadd.f32 %v280, %v439
    %441 = vmatprep.mubr.f32.mxu0 0.0
    %442 = vmatmul.mubr.f32.gmra.mxu0 %v292
    %v443 = vpop.f32.mrf.mxu0
    %v444 = vadd.f32 %v285, %v443
    %v445 = vpop.f32.mrf.mxu0
    %v446 = vadd.f32 %v285, %v445
    %447 = vdwg.mxu0
    %v448 = vmax.f32 %v361, 0.0
    %v449 = vmax.f32 %v363, 0.0
    %v450 = vmax.f32 %v438, 0.0
    %v451 = vmax.f32 %v440, 0.0
    %v452 = vmax.f32 %v367, 0.0
    %v453 = vmax.f32 %v369, 0.0
    %v454 = vmax.f32 %v444, 0.0
    %v455 = vmax.f32 %v446, 0.0
    %456 = vst [vmem:[#allocation6] sm:$0xff] %v448
    %457 = vst [vmem:[#allocation6 + $0x8] sm:$0xff] %v449
    %458 = vst [vmem:[#allocation6 + $0x10] sm:$0xff] %v450
    %459 = vst [vmem:[#allocation6 + $0x18] sm:$0xff] %v451
    %460 = vst [vmem:[#allocation6 + $0x20] sm:$0xff] %v452
    %461 = vst [vmem:[#allocation6 + $0x28] sm:$0xff] %v453
    %462 = vst [vmem:[#allocation6 + $0x30] sm:$0xff] %v454
    %463 = vst [vmem:[#allocation6 + $0x38] sm:$0xff] %v455
    // Predicated region
    $region18: #{tpu_custom_call.1} parent=1 // pred_check
      _
    $region19: #{tpu_custom_call.1} parent=1 // pred_check_branch
      %465 = sbr.rel (0) target = $region21
    $region20: #{tpu_custom_call.1} parent=1 // pred_region
      %s467 = ssub.s32 1024, 1024
      %468 = vsyncadd [#allocation5], %s467
      %s469 = sshll.u32 [#allocation6], 4
      %s470 = int_to_ptr.vmem [resolvable:$true] %s469
      %475 = dma.vmem_to_hbm [thread:$0]  %s470, 1024, %s3, [#allocation5], 512, 512, 32
    $region21: #{tpu_custom_call.1} parent=1 // pred_fallthru
      _
    // Predicated region
    $region22: #{tpu_custom_call.1} parent=1 // pred_check
      _
    $region23: #{tpu_custom_call.1} parent=1 // pred_check_branch
      %477 = sbr.rel (0) target = $region25
    $region24: #{tpu_custom_call.1} parent=1 // pred_region
      %478 = dma.done [#allocation5], 1024
    $region25: #{tpu_custom_call.1} parent=1 // pred_fallthru
      _
    %479 = vsyncpa [#allocation4], 1
    %480 = vsyncpa [#allocation5], 1

</llo_original>
